<compile_context>
chip_gen: v5e
topology: v5e:2x2
jax: 0.10.0
libtpu: 0.0.40
codegen_flags: <defaults>
</compile_context>

<pallas_src>
import functools

import jax
import jax.numpy as jnp
from jax.experimental import pallas as pl
from jax.experimental.pallas import tpu as pltpu


def _biaffine_kernel(d_ref, we_ref, o_ref):
    # d_ref: (TM, D+1), we_ref: (D+1, TN), o_ref: (TM, TN)
    o_ref[...] = jnp.dot(
        d_ref[...], we_ref[...], preferred_element_type=jnp.float32
    ).astype(o_ref.dtype)


def _round_up(x, m):
    return ((x + m - 1) // m) * m


def _choose_tiles(Nd, Ne, tm, tn):
    """Clamp tiles to the problem and guarantee >=2 grid steps when possible."""
    TM = min(tm, _round_up(Nd, 8))      # sublane axis: multiple of 8
    TN = min(tn, _round_up(Ne, 128))    # lane axis: multiple of 128 (lane-dense vst)
    # v7x megacore: "parallel" grid axes only help if there are >=2 steps to
    # shard across the two TensorCores.  Prefer splitting the row (sublane)
    # axis so output stores stay wide and lane-dense.
    while pl.cdiv(Nd, TM) * pl.cdiv(Ne, TN) < 2:
        tm_half = max(8, _round_up(TM // 2, 8))
        tn_half = max(128, _round_up(TN // 2, 128))
        if TM > 8 and pl.cdiv(Nd, tm_half) >= 2:
            TM = tm_half
        elif TN > 128 and pl.cdiv(Ne, tn_half) >= 2:
            TN = tn_half
        elif TM > 8:
            TM = tm_half
        elif TN > 128:
            TN = tn_half
        else:
            break  # problem fits in a single minimal tile; nothing to split
    return TM, TN


@functools.partial(jax.jit, static_argnames=("tm", "tn", "out_dtype"))
def biaffine_attention(input_d, input_e, dep_weight, *, tm=512, tn=4096,
                       out_dtype=jnp.float32):
    """Pallas implementation of BiAAttention.forward.

    input_d:    (Nd, D) float32
    input_e:    (Ne, D) float32
    dep_weight: (D+1, D+1) float32
    returns:    (Nd, Ne) out_dtype  (float32 by default, matching PyTorch)
    """
    Nd, D = input_d.shape
    Ne, De = input_e.shape
    D1 = D + 1
    assert De == D and dep_weight.shape == (D1, D1)

    input_d = input_d.astype(jnp.float32)
    input_e = input_e.astype(jnp.float32)
    dep_weight = dep_weight.astype(jnp.float32)

    # Fold the e-side ones column and the tiny (D+1,D+1)x(D+1,Ne) contraction
    # in the wrapper:  we = dep_weight @ [e, 1].T   -> (D+1, Ne), negligible.
    we = dep_weight[:, :D] @ input_e.T + dep_weight[:, D:]                  # (D1, Ne)

    # Fold the d-side ones column (bias) into the GEMM: K becomes D+1 = 32.
    d_aug = jnp.concatenate([input_d, jnp.ones((Nd, 1), jnp.float32)], 1)   # (Nd, D1)

    TM, TN = _choose_tiles(Nd, Ne, tm, tn)
    grid_i = pl.cdiv(Nd, TM)
    grid_j = pl.cdiv(Ne, TN)
    out_itemsize = jnp.dtype(out_dtype).itemsize

    # Exact output shape: Pallas masks partial edge blocks; no pad/slice copies.
    return pl.pallas_call(
        _biaffine_kernel,
        out_shape=jax.ShapeDtypeStruct((Nd, Ne), out_dtype),
        grid=(grid_i, grid_j),
        in_specs=[
            pl.BlockSpec((TM, D1), lambda i, j: (i, 0)),   # d rows, full K
            pl.BlockSpec((D1, TN), lambda i, j: (0, j)),   # we columns, full K
        ],
        out_specs=pl.BlockSpec((TM, TN), lambda i, j: (i, j)),
        compiler_params=pltpu.CompilerParams(
            dimension_semantics=("parallel", "parallel"),
            vmem_limit_bytes=32 * 1024 * 1024,
        ),
        cost_estimate=pl.CostEstimate(
            flops=2 * Nd * Ne * D1,
            transcendentals=0,
            bytes_accessed=(4 * Nd * D1 * grid_j          # d re-read per j tile
                            + 4 * D1 * Ne * grid_i        # we re-read per i tile
                            + out_itemsize * Nd * Ne),    # output written once
        ),
    )(d_aug, we)


def xavier_uniform(key, shape, dtype=jnp.float32):
    fan_in, fan_out = shape[0], shape[1]
    bound = (6.0 / (fan_in + fan_out)) ** 0.5
    return jax.random.uniform(key, shape, dtype=dtype, minval=-bound, maxval=bound)


def _reference(input_d, input_e, dep_weight):
    Nd = input_d.shape[0]
    Ne = input_e.shape[0]
    d_aug = jnp.concatenate([input_d, jnp.ones((Nd, 1), jnp.float32)], axis=1)
    e_aug = jnp.concatenate([input_e, jnp.ones((Ne, 1), jnp.float32)], axis=1)
    return (d_aug @ dep_weight) @ e_aug.T


if __name__ == "__main__":
    # hparams.d_biaffine = 31  -> dep_weight is (32, 32)
    d_biaffine = 31

    key = jax.random.PRNGKey(0)
    k_w, k_d, k_e, k_d2, k_e2, k_d3, k_e3 = jax.random.split(key, 7)
    dep_weight = xavier_uniform(k_w, (d_biaffine + 1, d_biaffine + 1))

    # 1) Tiny single-tile case.
    Nd, Ne = 8, 8
    input_d = jax.random.normal(k_d, (Nd, d_biaffine), dtype=jnp.float32)
    input_e = jax.random.normal(k_e, (Ne, d_biaffine), dtype=jnp.float32)
    out = jax.block_until_ready(biaffine_attention(input_d, input_e, dep_weight))
    ref = _reference(input_d, input_e, dep_weight)
    assert out.shape == (Nd, Ne)
    assert jnp.allclose(out, ref, atol=1e-4, rtol=1e-4)

    # 2) Ragged case with small tiles: multi-step grid + masked edge blocks
    #    on both axes (no wrapper padding / output slice).
    Nd2, Ne2 = 20, 300
    input_d2 = jax.random.normal(k_d2, (Nd2, d_biaffine), dtype=jnp.float32)
    input_e2 = jax.random.normal(k_e2, (Ne2, d_biaffine), dtype=jnp.float32)
    out2 = jax.block_until_ready(
        biaffine_attention(input_d2, input_e2, dep_weight, tm=8, tn=128)
    )
    ref2 = _reference(input_d2, input_e2, dep_weight)
    assert out2.shape == (Nd2, Ne2)
    assert jnp.allclose(out2, ref2, atol=1e-4, rtol=1e-4)

    # 3) Default (large) tiles: exercises tile clamping and the >=2-grid-step
    #    megacore guard on a mid-size ragged problem.
    Nd3, Ne3 = 150, 200
    input_d3 = jax.random.normal(k_d3, (Nd3, d_biaffine), dtype=jnp.float32)
    input_e3 = jax.random.normal(k_e3, (Ne3, d_biaffine), dtype=jnp.float32)
    out3 = jax.block_until_ready(biaffine_attention(input_d3, input_e3, dep_weight))
    ref3 = _reference(input_d3, input_e3, dep_weight)
    assert out3.shape == (Nd3, Ne3)
    assert jnp.allclose(out3, ref3, atol=1e-4, rtol=1e-4)

    print("KERNEL_OK")
</pallas_src>

<mosaic_0001>
module attributes {stable_mosaic.version = 11 : i64} {
  func.func @_biaffine_kernel(%arg0: i32, %arg1: i32, %arg2: memref<8x32xf32, #tpu.memory_space<vmem>>, %arg3: memref<32x128xf32, #tpu.memory_space<vmem>>, %arg4: memref<8x128xf32, #tpu.memory_space<vmem>>) attributes {dimension_semantics = [#tpu.dimension_semantics<parallel>, #tpu.dimension_semantics<parallel>], iteration_bounds = array<i64: 1, 1>, scalar_prefetch = 0 : i64, scratch_operands = 0 : i64, tpu.core_type = #tpu.core_type<tc>, window_params = [{transform_indices = @transform_0, window_bounds = array<i64: 8, 32>}, {transform_indices = @transform_1, window_bounds = array<i64: 32, 128>}, {transform_indices = @transform_2, window_bounds = array<i64: 8, 128>}]} {
    %c0 = arith.constant 0 : index
    %c0_0 = arith.constant 0 : index
    %0 = vector.load %arg2[%c0, %c0_0] : memref<8x32xf32, #tpu.memory_space<vmem>>, vector<8x32xf32>
    %c0_1 = arith.constant 0 : index
    %c0_2 = arith.constant 0 : index
    %1 = vector.load %arg3[%c0_1, %c0_2] : memref<32x128xf32, #tpu.memory_space<vmem>>, vector<32x128xf32>
    %cst = arith.constant dense<0.000000e+00> : vector<8x128xf32>
    %2 = tpu.matmul %0, %1, %cst {dimension_numbers = #tpu.dot_dimension_numbers<[1], [0], [0], [1], [0, 0, 1, 1], [], []>} : vector<8x32xf32>, vector<32x128xf32>, vector<8x128xf32> -> vector<8x128xf32>
    %c0_3 = arith.constant 0 : index
    %c0_4 = arith.constant 0 : index
    %3 = vector.load %arg4[%c0_3, %c0_4] : memref<8x128xf32, #tpu.memory_space<vmem>>, vector<8x128xf32>
    tpu.vector_store %arg4[%c0_3, %c0_4], %2 {strides = array<i32>} : memref<8x128xf32, #tpu.memory_space<vmem>>, vector<8x128xf32>,
    return
  }
  func.func @transform_0(%arg0: i32, %arg1: i32) -> (i32, i32) {
    %c0_i32 = arith.constant 0 : i32
    %c0_i32_0 = arith.constant 0 : i32
    return %arg0, %c0_i32 : i32, i32
  }
  func.func @transform_1(%arg0: i32, %arg1: i32) -> (i32, i32) {
    %c0_i32 = arith.constant 0 : i32
    %c0_i32_0 = arith.constant 0 : i32
    return %c0_i32, %arg1 : i32, i32
  }
  func.func @transform_2(%arg0: i32, %arg1: i32) -> (i32, i32) {
    %c0_i32 = arith.constant 0 : i32
    return %arg0, %arg1 : i32, i32
  }
}

</mosaic_0001>

<llo_original>
// kernel: biaffine_attention.1
$region0: #{biaffine_attention.1}
  #allocation0 [shape = 'u32[]', space=smem, size = 0x4, offset = 0x4, fixed_abs, tag = 'smem constant byte address 0x4 - core index']
  #allocation1 [shape = 'u32[72,128]{1,0:T(1,128)}', space=vmem, size = 0x9000, scoped, tag = 'internal scratch']
  %s0 = inlined_call_operand.vmem [shape: f32[8,32], index: 0, kind: input, shape index: {}]
  %s1 = inlined_call_operand.vmem [shape: f32[32,8], index: 1, kind: input, shape index: {}]
  %s2 = inlined_call_operand.hbm [shape: f32[8,8], index: 2, kind: output, shape index: {}]
  %s3 = sld [smem:[#allocation0]]
  $region18: #{biaffine_attention.1} parent=0
    _
  %s5 = ssub.s32 1, %s3
  %s6 = scalar_select 0, %s5, %s3
  $region1: #{biaffine_attention.1} parent=0
    #allocation2 [shape = 'u8[4096]{0}', space=vmem, size = 0x1000, scoped, tag = 'output window, operand 0, single buffered']
    #allocation3 [shape = 's32[1]{0}', space=sflag, size = 0x4, scoped, tag = 'scoped memory for biaffine_attention.1']
    %7 = vsyncpa [#allocation3], 0
    // Predicated region
    $region2: #{biaffine_attention.1} parent=1 // pred_check
      _
    $region3: #{biaffine_attention.1} parent=1 // pred_check_branch
      %9 = sbr.rel (0) target = $region5
    $region4: #{biaffine_attention.1} parent=1 // pred_region
      _
    $region5: #{biaffine_attention.1} parent=1 // pred_fallthru
      _
    // Predicated region
    $region6: #{biaffine_attention.1} parent=1 // pred_check
      _
    $region7: #{biaffine_attention.1} parent=1 // pred_check_branch
      %11 = sbr.rel (0) target = $region9
    $region8: #{biaffine_attention.1} parent=1 // pred_region
      _
    $region9: #{biaffine_attention.1} parent=1 // pred_fallthru
      _
    %v12 = vld [vmem:[%s0] sm:$0xff]
    %v13 = vld [vmem:[%s1] sm:$0xff]
    %v14 = vld [vmem:[%s1 + $0x8] sm:$0xff]
    %v15 = vld [vmem:[%s1 + $0x10] sm:$0xff]
    %v16 = vld [vmem:[%s1 + $0x18] sm:$0xff]
    %vm17 = vcmask 261120
    %v19 = vsel %vm17, %v12, 0
    %21 = vmatpush.msra.mxu0 0.0
    %22 = vmatpush.msra.mxu0 0.0
    %23 = vmatpush.msra.mxu0 0.0
    %24 = vmatpush.msra.mxu0 0.0
    %25 = vmatpush.msra.mxu0 0.0
    %26 = vmatpush.msra.mxu0 0.0
    %27 = vmatpush.msra.mxu0 0.0
    %28 = vmatpush.msra.mxu0 0.0
    %29 = vmatpush.msra.mxu0 0.0
    %30 = vmatpush.msra.mxu0 0.0
    %31 = vmatpush.msra.mxu0 0.0
    %32 = vmatpush.msra.mxu0 0.0
    %33 = vmatpush.msra.mxu0 %v16
    %34 = vmatpush.msra.mxu0 %v15
    %35 = vmatpush.msra.mxu0 %v14
    %36 = vmatpush.msra.mxu0 %v13
    %37 = vmatmul.f32.gmra.mxu0 %v19
    %v38 = vpop.f32.mrf.mxu0
    %v39 = vadd.f32 0.0, %v38
    %40 = vdwg.mxu0
    %41 = vst [vmem:[#allocation2] sm:$0xff] %v39
    // Predicated region
    $region10: #{biaffine_attention.1} parent=1 // pred_check
      _
    $region11: #{biaffine_attention.1} parent=1 // pred_check_branch
      %43 = sbr.rel (0) target = $region13
    $region12: #{biaffine_attention.1} parent=1 // pred_region
      %45 = vsyncadd [#allocation3], 0
      %s47 = sshll.u32 [#allocation2], 4
      %s48 = int_to_ptr.vmem [resolvable:$true] %s47
      %s49 = sshll.u32 %s2, 4
      %s50 = int_to_ptr.hbm [resolvable:$true] %s49
      %52 = dma.vmem_to_hbm [thread:$0]  %s48, 128, %s50, [#allocation3]
    $region13: #{biaffine_attention.1} parent=1 // pred_fallthru
      _
    // Predicated region
    $region14: #{biaffine_attention.1} parent=1 // pred_check
      _
    $region15: #{biaffine_attention.1} parent=1 // pred_check_branch
      %54 = sbr.rel (0) target = $region17
    $region16: #{biaffine_attention.1} parent=1 // pred_region
      %56 = dma.done [#allocation3], 128
    $region17: #{biaffine_attention.1} parent=1 // pred_fallthru
      _
    %57 = vsyncpa [#allocation3], 1

</llo_original>
